<compile_context>
chip_gen: v5e
topology: v5e:2x2
jax: 0.10.0
libtpu: 0.0.40
codegen_flags: <defaults>
</compile_context>

<pallas_src>
import functools
from typing import Any, NamedTuple, Sequence, Tuple

import jax
import jax.numpy as jnp
from jax.experimental import pallas as pl
from jax.experimental.pallas import tpu as pltpu


# ----------------------------------------------------------------------------- helpers
def _round_up(n: int, m: int) -> int:
    return ((n + m - 1) // m) * m


def _cdiv(a: int, b: int) -> int:
    return -(-a // b)


def _pad2d(a, rows: int, cols: int):
    return jnp.pad(a, ((0, rows - a.shape[0]), (0, cols - a.shape[1])))


@functools.lru_cache(maxsize=1)
def _tpu_topology() -> Tuple[int, int]:
    """(per-TC VMEM capacity bytes, TensorCores per chip) with conservative fallbacks."""
    vmem_cap = None
    num_tc = 1
    try:
        info = pltpu.get_tpu_info()
        for name in ("vmem_capacity_bytes", "vmem_bytes", "vmem_size_bytes"):
            v = getattr(info, name, None)
            if v:
                vmem_cap = int(v)
                break
        for name in ("num_cores", "core_count", "num_tensorcores",
                     "tensorcores_per_chip", "cores_per_chip"):
            v = getattr(info, name, None)
            if v:
                num_tc = max(1, int(v))
                break
    except Exception:
        pass
    if vmem_cap is None:
        vmem_cap = 64 << 20   # assume the smallest (v7x per-TC) if query fails
    return vmem_cap, num_tc


def _default_tm(batch: int, sublane: int, max_pad: int, num_tc: int) -> int:
    """Largest-that-fits batch tile; even tile count on multi-TC (v7x) parts."""
    cap = 128 if max_pad >= 512 else 256      # vreg-pressure guard on wide fan_out
    b_r = _round_up(batch, sublane)
    min_tm = max(sublane, 64)                 # below this, tiles are pure launch overhead
    if num_tc > 1 and b_r >= num_tc * min_tm:
        n_tiles = num_tc * max(1, _cdiv(b_r, num_tc * cap))
    else:
        n_tiles = max(1, _cdiv(b_r, cap))
    return min(cap, _round_up(_cdiv(b_r, n_tiles), sublane))


# --------------------------------------------------------------------- prepared params
class PreparedParams(NamedTuple):
    flat: Tuple[Any, ...]      # interleaved padded (W in compute_dtype, b in f32)
    compute_dtype: Any
    in_total: int              # in_features + condition_features (layer-0 fan_in)
    out_features: int
    out_pad: int               # lane-padded final fan_out
    max_pad: int               # largest lane-padded fan_out over all layers
    n_layers: int


def prepare_params(params: Sequence[Tuple[Any, Any]], *,
                   compute_dtype=jnp.float32) -> PreparedParams:
    """Pad/cast weights once (hoisted out of the per-step hot path).

    params: list of (W, b) with W shape (fan_in, fan_out)  [transposed vs. PyTorch].
    Fan_outs are zero-padded to multiples of 128 (lane-dense matmuls); padded weight
    rows/cols and bias entries are zero so the math stays exact.  Biases stay f32.
    """
    if not params:
        raise ValueError("params must contain at least one (W, b) layer")
    cd = jnp.dtype(compute_dtype)
    in_total = int(params[0][0].shape[0])

    flat = []
    prev_rows = in_total       # layer-0 fan_in stays unpadded (full-extent K block)
    prev_fan_out = in_total
    max_pad = 0
    for li, (w, b) in enumerate(params):
        fan_in, fan_out = int(w.shape[0]), int(w.shape[1])
        if fan_in != prev_fan_out:
            raise ValueError(f"layer {li}: fan_in {fan_in} != previous fan_out {prev_fan_out}")
        fo_pad = _round_up(fan_out, 128)
        max_pad = max(max_pad, fo_pad)
        flat.append(_pad2d(jnp.asarray(w, cd), prev_rows, fo_pad))
        flat.append(_pad2d(jnp.asarray(b, jnp.float32).reshape(1, -1), 1, fo_pad))
        prev_rows = fo_pad
        prev_fan_out = fan_out

    return PreparedParams(flat=tuple(flat), compute_dtype=cd, in_total=in_total,
                          out_features=prev_fan_out, out_pad=prev_rows,
                          max_pad=max_pad, n_layers=len(params))


# ------------------------------------------------------------------------------ kernel
def _make_mlp_kernel(n_layers: int):
    """Fused MLP: [Linear -> ReLU] * (L-1) -> Linear, weights resident in VMEM."""

    def kernel(x_ref, *refs):
        out_ref = refs[-1]
        wb = refs[:-1]

        # layer 0: single dot over the (already concatenated) x1|condition input
        h = jnp.dot(x_ref[...], wb[0][...], preferred_element_type=jnp.float32)
        h = h + wb[1][...]                       # bias kept in f32
        if n_layers > 1:
            h = jnp.maximum(h, 0.0)              # ReLU; eval-mode Dropout is identity

        for li in range(1, n_layers):
            w = wb[2 * li][...]
            b = wb[2 * li + 1][...]
            # cast the f32 accumulator back to the operand dtype; MXU accumulates in f32
            h = jnp.dot(h.astype(w.dtype), w, preferred_element_type=jnp.float32)
            h = h + b
            if li < n_layers - 1:
                h = jnp.maximum(h, 0.0)

        out_ref[...] = h[:, : out_ref.shape[-1]].astype(out_ref.dtype)

    return kernel


# ----------------------------------------------------------------------------- wrapper
def autoregressive_network_forward(x1, params, *, condition=None, compute_dtype=None,
                                   tm=None, lane_dense_output=None):
    """JAX/Pallas equivalent of AutoRegressiveNetwork.forward.

    x1:        (batch, in_features)
    condition: (batch, condition_features) or None
    params:    PreparedParams (preferred, see prepare_params) or list of (W, b) with
               W shape (fan_in, fan_out)  [transposed vs. PyTorch].
    """
    if condition is not None and condition.shape[-1] == 0:
        condition = None
    if condition is not None and condition.shape[0] != x1.shape[0]:
        raise ValueError("batch mismatch between x1 and condition")

    if isinstance(params, PreparedParams):
        prep = params
        if compute_dtype is not None and jnp.dtype(compute_dtype) != jnp.dtype(prep.compute_dtype):
            raise ValueError("compute_dtype conflicts with prepared params")
    else:
        prep = prepare_params(params, compute_dtype=compute_dtype or x1.dtype)

    cd = jnp.dtype(prep.compute_dtype)
    out_dtype = x1.dtype
    batch = x1.shape[0]

    # ---- fuse the concat in the wrapper (tiny array); single layer-0 dot in-kernel ----
    x = jnp.concatenate([x1, condition], axis=-1) if condition is not None else x1
    if x.shape[-1] != prep.in_total:
        raise ValueError(f"first-layer fan_in {prep.in_total} != in+cond {x.shape[-1]}")
    x = x.astype(cd)
    in_total = prep.in_total

    # ---- batch tiling (sublane-aligned for the compute dtype; big tiles by default) ----
    sublane = max(8, 32 // cd.itemsize)
    vmem_cap, num_tc = _tpu_topology()
    if tm is None:
        tm = _default_tm(batch, sublane, prep.max_pad, num_tc)
    tm = _round_up(int(tm), sublane)
    batch_pad = _round_up(batch, tm)
    grid_n = batch_pad // tm
    if batch_pad != batch:
        x = jnp.pad(x, ((0, batch_pad - batch), (0, 0)))

    # ---- output layout: lane-dense for single-tile/latency, unpadded for big batches ----
    if lane_dense_output is None:
        lane_dense_output = (grid_n == 1)
    out_cols = prep.out_pad if lane_dense_output else prep.out_features

    # ---- specs: stream the activations, keep weights/biases VMEM-resident ----
    in_specs = [pl.BlockSpec((tm, in_total), lambda i: (i, 0))]
    for arr in prep.flat:
        in_specs.append(pl.BlockSpec(arr.shape, lambda i: (0, 0)))
    out_specs = pl.BlockSpec((tm, out_cols), lambda i: (i, 0))

    # ---- hardware-aware VMEM budget ----
    weight_bytes = sum(int(a.size) * a.dtype.itemsize for a in prep.flat)
    stream_bytes = (2 * tm * in_total * cd.itemsize
                    + 2 * tm * out_cols * jnp.dtype(out_dtype).itemsize)
    act_bytes = 4 * tm * prep.max_pad * 4            # a few live f32 activations
    needed = 2 * weight_bytes + stream_bytes + act_bytes + (4 << 20)
    hard_cap = (56 << 20) if vmem_cap <= (64 << 20) else (100 << 20)
    vmem_limit = int(min(max(needed, 16 << 20), hard_cap))

    out = pl.pallas_call(
        _make_mlp_kernel(prep.n_layers),
        out_shape=jax.ShapeDtypeStruct((batch_pad, out_cols), out_dtype),
        grid=(grid_n,),
        in_specs=in_specs,
        out_specs=out_specs,
        compiler_params=pltpu.CompilerParams(
            dimension_semantics=("parallel",),
            vmem_limit_bytes=vmem_limit,
        ),
    )(x, *prep.flat)

    if batch_pad != batch or out_cols != prep.out_features:
        out = out[:batch, :prep.out_features]
    return out


# ------------------------------------------------------------------------ init / ref
def init_params(key, in_features, condition_features, hidden_features,
                hidden_layers, out_features):
    """PyTorch-Linear-style init: U(-1/sqrt(fan_in), 1/sqrt(fan_in)); W is (fan_in, fan_out)."""
    dims = ([in_features + condition_features]
            + [hidden_features] * hidden_layers
            + [out_features])
    params = []
    for fan_in, fan_out in zip(dims[:-1], dims[1:]):
        key, kw, kb = jax.random.split(key, 3)
        bound = 1.0 / jnp.sqrt(jnp.float32(fan_in))
        w = jax.random.uniform(kw, (fan_in, fan_out), jnp.float32, -bound, bound)
        b = jax.random.uniform(kb, (fan_out,), jnp.float32, -bound, bound)
        params.append((w, b))
    return params


def reference_forward(x1, params, *, condition=None, compute_dtype=None):
    """Pure-JAX reference matching the kernel's dtype semantics (f32 biases)."""
    dt = jnp.dtype(compute_dtype or x1.dtype)
    x = jnp.concatenate([x1, condition], axis=-1) if condition is not None else x1
    h = x.astype(dt)
    for i, (w, b) in enumerate(params):
        h = jnp.dot(h.astype(dt), w.astype(dt), preferred_element_type=jnp.float32)
        h = h + b.astype(jnp.float32)
        if i < len(params) - 1:
            h = jnp.maximum(h, 0.0)
    return h.astype(x1.dtype)


# --------------------------------------------------------------------------------- main
if __name__ == "__main__":
    batch = 100
    in_features = 8
    condition_features = 8
    hidden_features = 32
    hidden_layers = 3          # -> in_layer + (hidden_layers - 1) hidden + out_layer
    out_features = 16

    key = jax.random.PRNGKey(0)
    key, kx, kc = jax.random.split(key, 3)
    x1 = jax.random.normal(kx, (batch, in_features), jnp.float32)
    condition = jax.random.normal(kc, (batch, condition_features), jnp.float32)

    params = init_params(key, in_features, condition_features,
                         hidden_features, hidden_layers, out_features)
    ref = reference_forward(x1, params, condition=condition)

    # ---- recommended usage: prepare weights once, jit the forward, default tile ----
    prep_f32 = prepare_params(params, compute_dtype=jnp.float32)
    fwd = jax.jit(lambda x, c: autoregressive_network_forward(x, prep_f32, condition=c))
    out = jax.block_until_ready(fwd(x1, condition))
    assert out.shape == (batch, out_features)
    assert jnp.allclose(out, ref, atol=1e-4, rtol=1e-4), "f32 mismatch vs reference"

    # ---- test-only tiny tile: exercises multi-tile grid + unpadded-output path ----
    out_tiled = jax.block_until_ready(
        autoregressive_network_forward(x1, params, condition=condition, tm=32))
    assert jnp.allclose(out_tiled, ref, atol=1e-4, rtol=1e-4), "tiled-path mismatch"

    # ---- bf16 operands with f32 MXU accumulation (performance path); f32 biases ----
    prep_bf16 = prepare_params(params, compute_dtype=jnp.bfloat16)
    out_bf16 = jax.block_until_ready(
        autoregressive_network_forward(x1, prep_bf16, condition=condition))
    ref_bf16 = reference_forward(x1, params, condition=condition,
                                 compute_dtype=jnp.bfloat16)
    assert jnp.allclose(out_bf16, ref_bf16, atol=5e-2, rtol=5e-2), "bf16 mismatch"

    # ---- no-condition path (condition=None branch of forward()) ----
    params_nc = init_params(jax.random.PRNGKey(1), in_features, 0,
                            hidden_features, hidden_layers, out_features)
    out_nc = jax.block_until_ready(autoregressive_network_forward(x1, params_nc))
    ref_nc = reference_forward(x1, params_nc)
    assert jnp.allclose(out_nc, ref_nc, atol=1e-4, rtol=1e-4), "no-condition mismatch"

    print("KERNEL_OK")
</pallas_src>

<mosaic_0001>
module attributes {stable_mosaic.version = 11 : i64} {
  func.func @kernel(%arg0: i32, %arg1: memref<104x16xf32, #tpu.memory_space<vmem>>, %arg2: memref<16x128xf32, #tpu.memory_space<vmem>>, %arg3: memref<1x128xf32, #tpu.memory_space<vmem>>, %arg4: memref<128x128xf32, #tpu.memory_space<vmem>>, %arg5: memref<1x128xf32, #tpu.memory_space<vmem>>, %arg6: memref<128x128xf32, #tpu.memory_space<vmem>>, %arg7: memref<1x128xf32, #tpu.memory_space<vmem>>, %arg8: memref<128x128xf32, #tpu.memory_space<vmem>>, %arg9: memref<1x128xf32, #tpu.memory_space<vmem>>, %arg10: memref<104x128xf32, #tpu.memory_space<vmem>>) attributes {dimension_semantics = [#tpu.dimension_semantics<parallel>], iteration_bounds = array<i64: 1>, scalar_prefetch = 0 : i64, scratch_operands = 0 : i64, tpu.core_type = #tpu.core_type<tc>, window_params = [{transform_indices = @transform_0, window_bounds = array<i64: 104, 16>}, {pipeline_mode = #tpu.pipeline_mode<synchronous>, transform_indices = @transform_1, window_bounds = array<i64: 16, 128>}, {pipeline_mode = #tpu.pipeline_mode<synchronous>, transform_indices = @transform_2, window_bounds = array<i64: 1, 128>}, {pipeline_mode = #tpu.pipeline_mode<synchronous>, transform_indices = @transform_3, window_bounds = array<i64: 128, 128>}, {pipeline_mode = #tpu.pipeline_mode<synchronous>, transform_indices = @transform_4, window_bounds = array<i64: 1, 128>}, {pipeline_mode = #tpu.pipeline_mode<synchronous>, transform_indices = @transform_5, window_bounds = array<i64: 128, 128>}, {pipeline_mode = #tpu.pipeline_mode<synchronous>, transform_indices = @transform_6, window_bounds = array<i64: 1, 128>}, {pipeline_mode = #tpu.pipeline_mode<synchronous>, transform_indices = @transform_7, window_bounds = array<i64: 128, 128>}, {pipeline_mode = #tpu.pipeline_mode<synchronous>, transform_indices = @transform_8, window_bounds = array<i64: 1, 128>}, {transform_indices = @transform_9, window_bounds = array<i64: 104, 128>}]} {
    %c0 = arith.constant 0 : index
    %c0_0 = arith.constant 0 : index
    %0 = vector.load %arg1[%c0, %c0_0] : memref<104x16xf32, #tpu.memory_space<vmem>>, vector<104x16xf32>
    %c0_1 = arith.constant 0 : index
    %c0_2 = arith.constant 0 : index
    %1 = vector.load %arg2[%c0_1, %c0_2] : memref<16x128xf32, #tpu.memory_space<vmem>>, vector<16x128xf32>
    %cst = arith.constant dense<0.000000e+00> : vector<104x128xf32>
    %2 = tpu.matmul %0, %1, %cst {dimension_numbers = #tpu.dot_dimension_numbers<[1], [0], [0], [1], [0, 0, 1, 1], [], []>} : vector<104x16xf32>, vector<16x128xf32>, vector<104x128xf32> -> vector<104x128xf32>
    %c0_3 = arith.constant 0 : index
    %c0_4 = arith.constant 0 : index
    %3 = vector.load %arg3[%c0_3, %c0_4] : memref<1x128xf32, #tpu.memory_space<vmem>>, vector<1x128xf32>
    %4 = vector.broadcast %3 : vector<1x128xf32> to vector<104x128xf32>
    %5 = arith.addf %2, %4 : vector<104x128xf32>
    %cst_5 = arith.constant 0.000000e+00 : f32
    %6 = vector.broadcast %cst_5 : f32 to vector<104x128xf32>
    %7 = arith.maximumf %5, %6 : vector<104x128xf32>
    %c0_6 = arith.constant 0 : index
    %c0_7 = arith.constant 0 : index
    %8 = vector.load %arg4[%c0_6, %c0_7] : memref<128x128xf32, #tpu.memory_space<vmem>>, vector<128x128xf32>
    %c0_8 = arith.constant 0 : index
    %c0_9 = arith.constant 0 : index
    %9 = vector.load %arg5[%c0_8, %c0_9] : memref<1x128xf32, #tpu.memory_space<vmem>>, vector<1x128xf32>
    %cst_10 = arith.constant dense<0.000000e+00> : vector<104x128xf32>
    %10 = tpu.matmul %7, %8, %cst_10 {dimension_numbers = #tpu.dot_dimension_numbers<[1], [0], [0], [1], [0, 0, 1, 1], [], []>} : vector<104x128xf32>, vector<128x128xf32>, vector<104x128xf32> -> vector<104x128xf32>
    %11 = vector.broadcast %9 : vector<1x128xf32> to vector<104x128xf32>
    %12 = arith.addf %10, %11 : vector<104x128xf32>
    %cst_11 = arith.constant 0.000000e+00 : f32
    %13 = vector.broadcast %cst_11 : f32 to vector<104x128xf32>
    %14 = arith.maximumf %12, %13 : vector<104x128xf32>
    %c0_12 = arith.constant 0 : index
    %c0_13 = arith.constant 0 : index
    %15 = vector.load %arg6[%c0_12, %c0_13] : memref<128x128xf32, #tpu.memory_space<vmem>>, vector<128x128xf32>
    %c0_14 = arith.constant 0 : index
    %c0_15 = arith.constant 0 : index
    %16 = vector.load %arg7[%c0_14, %c0_15] : memref<1x128xf32, #tpu.memory_space<vmem>>, vector<1x128xf32>
    %cst_16 = arith.constant dense<0.000000e+00> : vector<104x128xf32>
    %17 = tpu.matmul %14, %15, %cst_16 {dimension_numbers = #tpu.dot_dimension_numbers<[1], [0], [0], [1], [0, 0, 1, 1], [], []>} : vector<104x128xf32>, vector<128x128xf32>, vector<104x128xf32> -> vector<104x128xf32>
    %18 = vector.broadcast %16 : vector<1x128xf32> to vector<104x128xf32>
    %19 = arith.addf %17, %18 : vector<104x128xf32>
    %cst_17 = arith.constant 0.000000e+00 : f32
    %20 = vector.broadcast %cst_17 : f32 to vector<104x128xf32>
    %21 = arith.maximumf %19, %20 : vector<104x128xf32>
    %c0_18 = arith.constant 0 : index
    %c0_19 = arith.constant 0 : index
    %22 = vector.load %arg8[%c0_18, %c0_19] : memref<128x128xf32, #tpu.memory_space<vmem>>, vector<128x128xf32>
    %c0_20 = arith.constant 0 : index
    %c0_21 = arith.constant 0 : index
    %23 = vector.load %arg9[%c0_20, %c0_21] : memref<1x128xf32, #tpu.memory_space<vmem>>, vector<1x128xf32>
    %cst_22 = arith.constant dense<0.000000e+00> : vector<104x128xf32>
    %24 = tpu.matmul %21, %22, %cst_22 {dimension_numbers = #tpu.dot_dimension_numbers<[1], [0], [0], [1], [0, 0, 1, 1], [], []>} : vector<104x128xf32>, vector<128x128xf32>, vector<104x128xf32> -> vector<104x128xf32>
    %25 = vector.broadcast %23 : vector<1x128xf32> to vector<104x128xf32>
    %26 = arith.addf %24, %25 : vector<104x128xf32>
    %c0_23 = arith.constant 0 : index
    %c0_24 = arith.constant 0 : index
    %27 = vector.load %arg10[%c0_23, %c0_24] : memref<104x128xf32, #tpu.memory_space<vmem>>, vector<104x128xf32>
    tpu.vector_store %arg10[%c0_23, %c0_24], %26 {strides = array<i32>} : memref<104x128xf32, #tpu.memory_space<vmem>>, vector<104x128xf32>,
    return
  }
  func.func @transform_0(%arg0: i32) -> (i32, i32) {
    %c0_i32 = arith.constant 0 : i32
    %c0_i32_0 = arith.constant 0 : i32
    return %arg0, %c0_i32 : i32, i32
  }
  func.func @transform_1(%arg0: i32) -> (i32, i32) {
    %c0_i32 = arith.constant 0 : i32
    %c0_i32_0 = arith.constant 0 : i32
    %c0_i32_1 = arith.constant 0 : i32
    return %c0_i32, %c0_i32_0 : i32, i32
  }
  func.func @transform_2(%arg0: i32) -> (i32, i32) {
    %c0_i32 = arith.constant 0 : i32
    %c0_i32_0 = arith.constant 0 : i32
    %c0_i32_1 = arith.constant 0 : i32
    return %c0_i32, %c0_i32_0 : i32, i32
  }
  func.func @transform_3(%arg0: i32) -> (i32, i32) {
    %c0_i32 = arith.constant 0 : i32
    %c0_i32_0 = arith.constant 0 : i32
    %c0_i32_1 = arith.constant 0 : i32
    return %c0_i32, %c0_i32_0 : i32, i32
  }
  func.func @transform_4(%arg0: i32) -> (i32, i32) {
    %c0_i32 = arith.constant 0 : i32
    %c0_i32_0 = arith.constant 0 : i32
    %c0_i32_1 = arith.constant 0 : i32
    return %c0_i32, %c0_i32_0 : i32, i32
  }
  func.func @transform_5(%arg0: i32) -> (i32, i32) {
    %c0_i32 = arith.constant 0 : i32
    %c0_i32_0 = arith.constant 0 : i32
    %c0_i32_1 = arith.constant 0 : i32
    return %c0_i32, %c0_i32_0 : i32, i32
  }
  func.func @transform_6(%arg0: i32) -> (i32, i32) {
    %c0_i32 = arith.constant 0 : i32
    %c0_i32_0 = arith.constant 0 : i32
    %c0_i32_1 = arith.constant 0 : i32
    return %c0_i32, %c0_i32_0 : i32, i32
  }
  func.func @transform_7(%arg0: i32) -> (i32, i32) {
    %c0_i32 = arith.constant 0 : i32
    %c0_i32_0 = arith.constant 0 : i32
    %c0_i32_1 = arith.constant 0 : i32
    return %c0_i32, %c0_i32_0 : i32, i32
  }
  func.func @transform_8(%arg0: i32) -> (i32, i32) {
    %c0_i32 = arith.constant 0 : i32
    %c0_i32_0 = arith.constant 0 : i32
    %c0_i32_1 = arith.constant 0 : i32
    return %c0_i32, %c0_i32_0 : i32, i32
  }
  func.func @transform_9(%arg0: i32) -> (i32, i32) {
    %c0_i32 = arith.constant 0 : i32
    %c0_i32_0 = arith.constant 0 : i32
    return %arg0, %c0_i32 : i32, i32
  }
}

</mosaic_0001>

<llo_original>
// kernel: _lambda_.1
$region0: #{_lambda_.1}
  #allocation0 [shape = 'u32[]', space=smem, size = 0x4, offset = 0x4, fixed_abs, tag = 'smem constant byte address 0x4 - core index']
  #allocation1 [shape = 'u32[72,128]{1,0:T(1,128)}', space=vmem, size = 0x9000, scoped, tag = 'internal scratch']
  %s0 = inlined_call_operand.vmem [shape: f32[104,16], index: 0, kind: input, shape index: {}]
  %s1 = inlined_call_operand.vmem [shape: f32[16,128], index: 1, kind: input, shape index: {}]
  %s2 = inlined_call_operand.vmem [shape: f32[1,128], index: 2, kind: input, shape index: {}]
  %s3 = inlined_call_operand.hbm [shape: f32[128,128], index: 3, kind: input, shape index: {}]
  %s4 = inlined_call_operand.vmem [shape: f32[1,128], index: 4, kind: input, shape index: {}]
  %s5 = inlined_call_operand.vmem [shape: f32[128,128], index: 5, kind: input, shape index: {}]
  %s6 = inlined_call_operand.vmem [shape: f32[1,128], index: 6, kind: input, shape index: {}]
  %s7 = inlined_call_operand.vmem [shape: f32[128,128], index: 7, kind: input, shape index: {}]
  %s8 = inlined_call_operand.vmem [shape: f32[1,128], index: 8, kind: input, shape index: {}]
  %s9 = inlined_call_operand.vmem [shape: f32[104,128], index: 9, kind: output, shape index: {}]
  %s10 = sld [smem:[#allocation0]]
  $region50: #{_lambda_.1} parent=0
    _
  %s12 = ssub.s32 1, %s10
  %s13 = scalar_select 0, %s12, %s10
  $region1: #{_lambda_.1} parent=0
    #allocation2 [shape = 'u8[65536]{0}', space=vmem, size = 0x10000, scoped, tag = 'input window, operand 3, single buffered']
    #allocation3 [shape = 's32[1]{0}', space=sflag, size = 0x4, scoped, tag = 'scoped memory for _lambda_.1']
    %14 = vsyncpa [#allocation3], 0
    // Predicated region
    $region2: #{_lambda_.1} parent=1 // pred_check
      _
    $region3: #{_lambda_.1} parent=1 // pred_check_branch
      %16 = sbr.rel (0) target = $region5
    $region4: #{_lambda_.1} parent=1 // pred_region
      _
    $region5: #{_lambda_.1} parent=1 // pred_fallthru
      _
    // Predicated region
    $region6: #{_lambda_.1} parent=1 // pred_check
      _
    $region7: #{_lambda_.1} parent=1 // pred_check_branch
      %18 = sbr.rel (0) target = $region9
    $region8: #{_lambda_.1} parent=1 // pred_region
      _
    $region9: #{_lambda_.1} parent=1 // pred_fallthru
      _
    // Predicated region
    $region10: #{_lambda_.1} parent=1 // pred_check
      _
    $region11: #{_lambda_.1} parent=1 // pred_check_branch
      %20 = sbr.rel (0) target = $region13
    $region12: #{_lambda_.1} parent=1 // pred_region
      _
    $region13: #{_lambda_.1} parent=1 // pred_fallthru
      _
    // Predicated region
    $region14: #{_lambda_.1} parent=1 // pred_check
      _
    $region15: #{_lambda_.1} parent=1 // pred_check_branch
      %22 = sbr.rel (0) target = $region17
    $region16: #{_lambda_.1} parent=1 // pred_region
      %24 = vsyncadd [#allocation3], 0
      %s25 = sshll.u32 %s3, 4
      %s26 = int_to_ptr.hbm [resolvable:$true] %s25
      %s27 = sshll.u32 [#allocation2], 4
      %s28 = int_to_ptr.vmem [resolvable:$true] %s27
      %33 = dma.hbm_to_vmem [thread:$0]  %s26, 2048, %s28, [#allocation3], 128, 128, 8
    $region17: #{_lambda_.1} parent=1 // pred_fallthru
      _
    // Predicated region
    $region18: #{_lambda_.1} parent=1 // pred_check
      _
    $region19: #{_lambda_.1} parent=1 // pred_check_branch
      %35 = sbr.rel (0) target = $region21
    $region20: #{_lambda_.1} parent=1 // pred_region
      _
    $region21: #{_lambda_.1} parent=1 // pred_fallthru
      _
    // Predicated region
    $region22: #{_lambda_.1} parent=1 // pred_check
      _
    $region23: #{_lambda_.1} parent=1 // pred_check_branch
      %37 = sbr.rel (0) target = $region25
    $region24: #{_lambda_.1} parent=1 // pred_region
      _
    $region25: #{_lambda_.1} parent=1 // pred_fallthru
      _
    // Predicated region
    $region26: #{_lambda_.1} parent=1 // pred_check
      _
    $region27: #{_lambda_.1} parent=1 // pred_check_branch
      %39 = sbr.rel (0) target = $region29
    $region28: #{_lambda_.1} parent=1 // pred_region
      _
    $region29: #{_lambda_.1} parent=1 // pred_fallthru
      _
    // Predicated region
    $region30: #{_lambda_.1} parent=1 // pred_check
      _
    $region31: #{_lambda_.1} parent=1 // pred_check_branch
      %41 = sbr.rel (0) target = $region33
    $region32: #{_lambda_.1} parent=1 // pred_region
      _
    $region33: #{_lambda_.1} parent=1 // pred_fallthru
      _
    // Predicated region
    $region34: #{_lambda_.1} parent=1 // pred_check
      _
    $region35: #{_lambda_.1} parent=1 // pred_check_branch
      %43 = sbr.rel (0) target = $region37
    $region36: #{_lambda_.1} parent=1 // pred_region
      _
    $region37: #{_lambda_.1} parent=1 // pred_fallthru
      _
    // Predicated region
    $region38: #{_lambda_.1} parent=1 // pred_check
      _
    $region39: #{_lambda_.1} parent=1 // pred_check_branch
      %45 = sbr.rel (0) target = $region41
    $region40: #{_lambda_.1} parent=1 // pred_region
      %47 = dma.done [#allocation3], 2048
    $region41: #{_lambda_.1} parent=1 // pred_fallthru
      _
    %v48 = vld [vmem:[%s0] sm:$0xff]
    %v49 = vld [vmem:[%s0 + $0x8] sm:$0xff]
    %v50 = vld [vmem:[%s0 + $0x10] sm:$0xff]
    %v51 = vld [vmem:[%s0 + $0x18] sm:$0xff]
    %v52 = vld [vmem:[%s0 + $0x20] sm:$0xff]
    %v53 = vld [vmem:[%s0 + $0x28] sm:$0xff]
    %v54 = vld [vmem:[%s0 + $0x30] sm:$0xff]
    %v55 = vld [vmem:[%s0 + $0x38] sm:$0xff]
    %v56 = vld [vmem:[%s0 + $0x40] sm:$0xff]
    %v57 = vld [vmem:[%s0 + $0x48] sm:$0xff]
    %v58 = vld [vmem:[%s0 + $0x50] sm:$0xff]
    %v59 = vld [vmem:[%s0 + $0x58] sm:$0xff]
    %v60 = vld [vmem:[%s0 + $0x60] sm:$0xff]
    %v61 = vld [vmem:[%s1] sm:$0xff]
    %v62 = vld [vmem:[%s1 + $0x8] sm:$0xff]
    %v63 = vld [vmem:[%s2] sm:$0x1]
    %v65 = vperm.slane %v63, 0
    %vm67 = vcmask 130048
    %v69 = vsel %vm67, %v48, 0
    %v72 = vsel %vm67, %v49, 0
    %v75 = vsel %vm67, %v50, 0
    %v78 = vsel %vm67, %v51, 0
    %v81 = vsel %vm67, %v52, 0
    %v84 = vsel %vm67, %v53, 0
    %v87 = vsel %vm67, %v54, 0
    %v90 = vsel %vm67, %v55, 0
    %v93 = vsel %vm67, %v56, 0
    %v96 = vsel %vm67, %v57, 0
    %v99 = vsel %vm67, %v58, 0
    %v102 = vsel %vm67, %v59, 0
    %v105 = vsel %vm67, %v60, 0
    %107 = vmatpush.msra.mxu0 0.0
    %108 = vmatpush.msra.mxu0 0.0
    %109 = vmatpush.msra.mxu0 0.0
    %110 = vmatpush.msra.mxu0 0.0
    %111 = vmatpush.msra.mxu0 0.0
    %112 = vmatpush.msra.mxu0 0.0
    %113 = vmatpush.msra.mxu0 0.0
    %114 = vmatpush.msra.mxu0 0.0
    %115 = vmatpush.msra.mxu0 0.0
    %116 = vmatpush.msra.mxu0 0.0
    %117 = vmatpush.msra.mxu0 0.0
    %118 = vmatpush.msra.mxu0 0.0
    %119 = vmatpush.msra.mxu0 0.0
    %120 = vmatpush.msra.mxu0 0.0
    %121 = vmatpush.msra.mxu0 %v62
    %122 = vmatpush.msra.mxu0 %v61
    %123 = vmatmul.f32.gmra.mxu0 %v69
    %v124 = vpop.f32.mrf.mxu0
    %v125 = vadd.f32 %v65, %v124
    %126 = vmatmul.f32.gmra.mxu0 %v72
    %v127 = vpop.f32.mrf.mxu0
    %v128 = vadd.f32 %v65, %v127
    %129 = vmatmul.f32.gmra.mxu0 %v75
    %v130 = vpop.f32.mrf.mxu0
    %v131 = vadd.f32 %v65, %v130
    %132 = vmatmul.f32.gmra.mxu0 %v78
    %v133 = vpop.f32.mrf.mxu0
    %v134 = vadd.f32 %v65, %v133
    %135 = vmatmul.f32.gmra.mxu0 %v81
    %v136 = vpop.f32.mrf.mxu0
    %v137 = vadd.f32 %v65, %v136
    %138 = vmatmul.f32.gmra.mxu0 %v84
    %v139 = vpop.f32.mrf.mxu0
    %v140 = vadd.f32 %v65, %v139
    %141 = vmatmul.f32.gmra.mxu0 %v87
    %v142 = vpop.f32.mrf.mxu0
    %v143 = vadd.f32 %v65, %v142
    %144 = vmatmul.f32.gmra.mxu0 %v90
    %v145 = vpop.f32.mrf.mxu0
    %v146 = vadd.f32 %v65, %v145
    %147 = vmatmul.f32.gmra.mxu0 %v93
    %v148 = vpop.f32.mrf.mxu0
    %v149 = vadd.f32 %v65, %v148
    %150 = vmatmul.f32.gmra.mxu0 %v96
    %v151 = vpop.f32.mrf.mxu0
    %v152 = vadd.f32 %v65, %v151
    %153 = vmatmul.f32.gmra.mxu0 %v99
    %v154 = vpop.f32.mrf.mxu0
    %v155 = vadd.f32 %v65, %v154
    %156 = vmatmul.f32.gmra.mxu0 %v102
    %v157 = vpop.f32.mrf.mxu0
    %v158 = vadd.f32 %v65, %v157
    %159 = vmatmul.f32.gmra.mxu0 %v105
    %v160 = vpop.f32.mrf.mxu0
    %v161 = vadd.f32 %v65, %v160
    %162 = vdwg.mxu0
    %v163 = vmax.f32 %v125, 0.0
    %v164 = vmax.f32 %v128, 0.0
    %v165 = vmax.f32 %v131, 0.0
    %v166 = vmax.f32 %v134, 0.0
    %v167 = vmax.f32 %v137, 0.0
    %v168 = vmax.f32 %v140, 0.0
    %v169 = vmax.f32 %v143, 0.0
    %v170 = vmax.f32 %v146, 0.0
    %v171 = vmax.f32 %v149, 0.0
    %v172 = vmax.f32 %v152, 0.0
    %v173 = vmax.f32 %v155, 0.0
    %v174 = vmax.f32 %v158, 0.0
    %v175 = vmax.f32 %v161, 0.0
    %v176 = vld [vmem:[#allocation2] sm:$0xff]
    %v177 = vld [vmem:[#allocation2 + $0x8] sm:$0xff]
    %v178 = vld [vmem:[#allocation2 + $0x10] sm:$0xff]
    %v179 = vld [vmem:[#allocation2 + $0x18] sm:$0xff]
    %v180 = vld [vmem:[#allocation2 + $0x20] sm:$0xff]
    %v181 = vld [vmem:[#allocation2 + $0x28] sm:$0xff]
    %v182 = vld [vmem:[#allocation2 + $0x30] sm:$0xff]
    %v183 = vld [vmem:[#allocation2 + $0x38] sm:$0xff]
    %v184 = vld [vmem:[#allocation2 + $0x40] sm:$0xff]
    %v185 = vld [vmem:[#allocation2 + $0x48] sm:$0xff]
    %v186 = vld [vmem:[#allocation2 + $0x50] sm:$0xff]
    %v187 = vld [vmem:[#allocation2 + $0x58] sm:$0xff]
    %v188 = vld [vmem:[#allocation2 + $0x60] sm:$0xff]
    %v189 = vld [vmem:[#allocation2 + $0x68] sm:$0xff]
    %v190 = vld [vmem:[#allocation2 + $0x70] sm:$0xff]
    %v191 = vld [vmem:[#allocation2 + $0x78] sm:$0xff]
    %v192 = vld [vmem:[%s4] sm:$0x1]
    %v194 = vperm.slane %v192, 0
    %196 = vmatpush.msra.mxu0 %v191
    %197 = vmatpush.msra.mxu0 %v190
    %198 = vmatpush.msra.mxu0 %v189
    %199 = vmatpush.msra.mxu0 %v188
    %200 = vmatpush.msra.mxu0 %v187
    %201 = vmatpush.msra.mxu0 %v186
    %202 = vmatpush.msra.mxu0 %v185
    %203 = vmatpush.msra.mxu0 %v184
    %204 = vmatpush.msra.mxu0 %v183
    %205 = vmatpush.msra.mxu0 %v182
    %206 = vmatpush.msra.mxu0 %v181
    %207 = vmatpush.msra.mxu0 %v180
    %208 = vmatpush.msra.mxu0 %v179
    %209 = vmatpush.msra.mxu0 %v178
    %210 = vmatpush.msra.mxu0 %v177
    %211 = vmatpush.msra.mxu0 %v176
    %212 = vmatmul.f32.gmra.mxu0 %v163
    %v213 = vpop.f32.mrf.mxu0
    %v214 = vadd.f32 %v194, %v213
    %215 = vmatmul.f32.gmra.mxu0 %v164
    %v216 = vpop.f32.mrf.mxu0
    %v217 = vadd.f32 %v194, %v216
    %218 = vmatmul.f32.gmra.mxu0 %v165
    %v219 = vpop.f32.mrf.mxu0
    %v220 = vadd.f32 %v194, %v219
    %221 = vmatmul.f32.gmra.mxu0 %v166
    %v222 = vpop.f32.mrf.mxu0
    %v223 = vadd.f32 %v194, %v222
    %224 = vmatmul.f32.gmra.mxu0 %v167
    %v225 = vpop.f32.mrf.mxu0
    %v226 = vadd.f32 %v194, %v225
    %227 = vmatmul.f32.gmra.mxu0 %v168
    %v228 = vpop.f32.mrf.mxu0
    %v229 = vadd.f32 %v194, %v228
    %230 = vmatmul.f32.gmra.mxu0 %v169
    %v231 = vpop.f32.mrf.mxu0
    %v232 = vadd.f32 %v194, %v231
    %233 = vmatmul.f32.gmra.mxu0 %v170
    %v234 = vpop.f32.mrf.mxu0
    %v235 = vadd.f32 %v194, %v234
    %236 = vmatmul.f32.gmra.mxu0 %v171
    %v237 = vpop.f32.mrf.mxu0
    %v238 = vadd.f32 %v194, %v237
    %239 = vmatmul.f32.gmra.mxu0 %v172
    %v240 = vpop.f32.mrf.mxu0
    %v241 = vadd.f32 %v194, %v240
    %242 = vmatmul.f32.gmra.mxu0 %v173
    %v243 = vpop.f32.mrf.mxu0
    %v244 = vadd.f32 %v194, %v243
    %245 = vmatmul.f32.gmra.mxu0 %v174
    %v246 = vpop.f32.mrf.mxu0
    %v247 = vadd.f32 %v194, %v246
    %248 = vmatmul.f32.gmra.mxu0 %v175
    %v249 = vpop.f32.mrf.mxu0
    %v250 = vadd.f32 %v194, %v249
    %251 = vdwg.mxu0
    %v252 = vmax.f32 %v214, 0.0
    %v253 = vmax.f32 %v217, 0.0
    %v254 = vmax.f32 %v220, 0.0
    %v255 = vmax.f32 %v223, 0.0
    %v256 = vmax.f32 %v226, 0.0
    %v257 = vmax.f32 %v229, 0.0
    %v258 = vmax.f32 %v232, 0.0
    %v259 = vmax.f32 %v235, 0.0
    %v260 = vmax.f32 %v238, 0.0
    %v261 = vmax.f32 %v241, 0.0
    %v262 = vmax.f32 %v244, 0.0
    %v263 = vmax.f32 %v247, 0.0
    %v264 = vmax.f32 %v250, 0.0
    %v265 = vld [vmem:[%s5] sm:$0xff]
    %v266 = vld [vmem:[%s5 + $0x8] sm:$0xff]
    %v267 = vld [vmem:[%s5 + $0x10] sm:$0xff]
    %v268 = vld [vmem:[%s5 + $0x18] sm:$0xff]
    %v269 = vld [vmem:[%s5 + $0x20] sm:$0xff]
    %v270 = vld [vmem:[%s5 + $0x28] sm:$0xff]
    %v271 = vld [vmem:[%s5 + $0x30] sm:$0xff]
    %v272 = vld [vmem:[%s5 + $0x38] sm:$0xff]
    %v273 = vld [vmem:[%s5 + $0x40] sm:$0xff]
    %v274 = vld [vmem:[%s5 + $0x48] sm:$0xff]
    %v275 = vld [vmem:[%s5 + $0x50] sm:$0xff]
    %v276 = vld [vmem:[%s5 + $0x58] sm:$0xff]
    %v277 = vld [vmem:[%s5 + $0x60] sm:$0xff]
    %v278 = vld [vmem:[%s5 + $0x68] sm:$0xff]
    %v279 = vld [vmem:[%s5 + $0x70] sm:$0xff]
    %v280 = vld [vmem:[%s5 + $0x78] sm:$0xff]
    %v281 = vld [vmem:[%s6] sm:$0x1]
    %v283 = vperm.slane %v281, 0
    %285 = vmatpush.msra.mxu0 %v280
    %286 = vmatpush.msra.mxu0 %v279
    %287 = vmatpush.msra.mxu0 %v278
    %288 = vmatpush.msra.mxu0 %v277
    %289 = vmatpush.msra.mxu0 %v276
    %290 = vmatpush.msra.mxu0 %v275
    %291 = vmatpush.msra.mxu0 %v274
    %292 = vmatpush.msra.mxu0 %v273
    %293 = vmatpush.msra.mxu0 %v272
    %294 = vmatpush.msra.mxu0 %v271
    %295 = vmatpush.msra.mxu0 %v270
    %296 = vmatpush.msra.mxu0 %v269
    %297 = vmatpush.msra.mxu0 %v268
    %298 = vmatpush.msra.mxu0 %v267
    %299 = vmatpush.msra.mxu0 %v266
    %300 = vmatpush.msra.mxu0 %v265
    %301 = vmatmul.f32.gmra.mxu0 %v252
    %v302 = vpop.f32.mrf.mxu0
    %v303 = vadd.f32 %v283, %v302
    %304 = vmatmul.f32.gmra.mxu0 %v253
    %v305 = vpop.f32.mrf.mxu0
    %v306 = vadd.f32 %v283, %v305
    %307 = vmatmul.f32.gmra.mxu0 %v254
    %v308 = vpop.f32.mrf.mxu0
    %v309 = vadd.f32 %v283, %v308
    %310 = vmatmul.f32.gmra.mxu0 %v255
    %v311 = vpop.f32.mrf.mxu0
    %v312 = vadd.f32 %v283, %v311
    %313 = vmatmul.f32.gmra.mxu0 %v256
    %v314 = vpop.f32.mrf.mxu0
    %v315 = vadd.f32 %v283, %v314
    %316 = vmatmul.f32.gmra.mxu0 %v257
    %v317 = vpop.f32.mrf.mxu0
    %v318 = vadd.f32 %v283, %v317
    %319 = vmatmul.f32.gmra.mxu0 %v258
    %v320 = vpop.f32.mrf.mxu0
    %v321 = vadd.f32 %v283, %v320
    %322 = vmatmul.f32.gmra.mxu0 %v259
    %v323 = vpop.f32.mrf.mxu0
    %v324 = vadd.f32 %v283, %v323
    %325 = vmatmul.f32.gmra.mxu0 %v260
    %v326 = vpop.f32.mrf.mxu0
    %v327 = vadd.f32 %v283, %v326
    %328 = vmatmul.f32.gmra.mxu0 %v261
    %v329 = vpop.f32.mrf.mxu0
    %v330 = vadd.f32 %v283, %v329
    %331 = vmatmul.f32.gmra.mxu0 %v262
    %v332 = vpop.f32.mrf.mxu0
    %v333 = vadd.f32 %v283, %v332
    %334 = vmatmul.f32.gmra.mxu0 %v263
    %v335 = vpop.f32.mrf.mxu0
    %v336 = vadd.f32 %v283, %v335
    %337 = vmatmul.f32.gmra.mxu0 %v264
    %v338 = vpop.f32.mrf.mxu0
    %v339 = vadd.f32 %v283, %v338
    %340 = vdwg.mxu0
    %v341 = vmax.f32 %v303, 0.0
    %v342 = vmax.f32 %v306, 0.0
    %v343 = vmax.f32 %v309, 0.0
    %v344 = vmax.f32 %v312, 0.0
    %v345 = vmax.f32 %v315, 0.0
    %v346 = vmax.f32 %v318, 0.0
    %v347 = vmax.f32 %v321, 0.0
    %v348 = vmax.f32 %v324, 0.0
    %v349 = vmax.f32 %v327, 0.0
    %v350 = vmax.f32 %v330, 0.0
    %v351 = vmax.f32 %v333, 0.0
    %v352 = vmax.f32 %v336, 0.0
    %v353 = vmax.f32 %v339, 0.0
    %v354 = vld [vmem:[%s7] sm:$0xff]
    %v355 = vld [vmem:[%s7 + $0x8] sm:$0xff]
    %v356 = vld [vmem:[%s7 + $0x10] sm:$0xff]
    %v357 = vld [vmem:[%s7 + $0x18] sm:$0xff]
    %v358 = vld [vmem:[%s7 + $0x20] sm:$0xff]
    %v359 = vld [vmem:[%s7 + $0x28] sm:$0xff]
    %v360 = vld [vmem:[%s7 + $0x30] sm:$0xff]
    %v361 = vld [vmem:[%s7 + $0x38] sm:$0xff]
    %v362 = vld [vmem:[%s7 + $0x40] sm:$0xff]
    %v363 = vld [vmem:[%s7 + $0x48] sm:$0xff]
    %v364 = vld [vmem:[%s7 + $0x50] sm:$0xff]
    %v365 = vld [vmem:[%s7 + $0x58] sm:$0xff]
    %v366 = vld [vmem:[%s7 + $0x60] sm:$0xff]
    %v367 = vld [vmem:[%s7 + $0x68] sm:$0xff]
    %v368 = vld [vmem:[%s7 + $0x70] sm:$0xff]
    %v369 = vld [vmem:[%s7 + $0x78] sm:$0xff]
    %v370 = vld [vmem:[%s8] sm:$0x1]
    %v372 = vperm.slane %v370, 0
    %374 = vmatpush.msra.mxu0 %v369
    %375 = vmatpush.msra.mxu0 %v368
    %376 = vmatpush.msra.mxu0 %v367
    %377 = vmatpush.msra.mxu0 %v366
    %378 = vmatpush.msra.mxu0 %v365
    %379 = vmatpush.msra.mxu0 %v364
    %380 = vmatpush.msra.mxu0 %v363
    %381 = vmatpush.msra.mxu0 %v362
    %382 = vmatpush.msra.mxu0 %v361
    %383 = vmatpush.msra.mxu0 %v360
    %384 = vmatpush.msra.mxu0 %v359
    %385 = vmatpush.msra.mxu0 %v358
    %386 = vmatpush.msra.mxu0 %v357
    %387 = vmatpush.msra.mxu0 %v356
    %388 = vmatpush.msra.mxu0 %v355
    %389 = vmatpush.msra.mxu0 %v354
    %390 = vmatmul.f32.gmra.mxu0 %v341
    %v391 = vpop.f32.mrf.mxu0
    %v392 = vadd.f32 %v372, %v391
    %393 = vmatmul.f32.gmra.mxu0 %v342
    %v394 = vpop.f32.mrf.mxu0
    %v395 = vadd.f32 %v372, %v394
    %396 = vmatmul.f32.gmra.mxu0 %v343
    %v397 = vpop.f32.mrf.mxu0
    %v398 = vadd.f32 %v372, %v397
    %399 = vmatmul.f32.gmra.mxu0 %v344
    %v400 = vpop.f32.mrf.mxu0
    %v401 = vadd.f32 %v372, %v400
    %402 = vmatmul.f32.gmra.mxu0 %v345
    %v403 = vpop.f32.mrf.mxu0
    %v404 = vadd.f32 %v372, %v403
    %405 = vmatmul.f32.gmra.mxu0 %v346
    %v406 = vpop.f32.mrf.mxu0
    %v407 = vadd.f32 %v372, %v406
    %408 = vmatmul.f32.gmra.mxu0 %v347
    %v409 = vpop.f32.mrf.mxu0
    %v410 = vadd.f32 %v372, %v409
    %411 = vmatmul.f32.gmra.mxu0 %v348
    %v412 = vpop.f32.mrf.mxu0
    %v413 = vadd.f32 %v372, %v412
    %414 = vmatmul.f32.gmra.mxu0 %v349
    %v415 = vpop.f32.mrf.mxu0
    %v416 = vadd.f32 %v372, %v415
    %417 = vmatmul.f32.gmra.mxu0 %v350
    %v418 = vpop.f32.mrf.mxu0
    %v419 = vadd.f32 %v372, %v418
    %420 = vmatmul.f32.gmra.mxu0 %v351
    %v421 = vpop.f32.mrf.mxu0
    %v422 = vadd.f32 %v372, %v421
    %423 = vmatmul.f32.gmra.mxu0 %v352
    %v424 = vpop.f32.mrf.mxu0
    %v425 = vadd.f32 %v372, %v424
    %426 = vmatmul.f32.gmra.mxu0 %v353
    %v427 = vpop.f32.mrf.mxu0
    %v428 = vadd.f32 %v372, %v427
    %429 = vdwg.mxu0
    %430 = vst [vmem:[%s9] sm:$0xff] %v392
    %431 = vst [vmem:[%s9 + $0x8] sm:$0xff] %v395
    %432 = vst [vmem:[%s9 + $0x10] sm:$0xff] %v398
    %433 = vst [vmem:[%s9 + $0x18] sm:$0xff] %v401
    %434 = vst [vmem:[%s9 + $0x20] sm:$0xff] %v404
    %435 = vst [vmem:[%s9 + $0x28] sm:$0xff] %v407
    %436 = vst [vmem:[%s9 + $0x30] sm:$0xff] %v410
    %437 = vst [vmem:[%s9 + $0x38] sm:$0xff] %v413
    %438 = vst [vmem:[%s9 + $0x40] sm:$0xff] %v416
    %439 = vst [vmem:[%s9 + $0x48] sm:$0xff] %v419
    %440 = vst [vmem:[%s9 + $0x50] sm:$0xff] %v422
    %441 = vst [vmem:[%s9 + $0x58] sm:$0xff] %v425
    %442 = vst [vmem:[%s9 + $0x60] sm:$0xff] %v428
    // Predicated region
    $region42: #{_lambda_.1} parent=1 // pred_check
      _
    $region43: #{_lambda_.1} parent=1 // pred_check_branch
      %444 = sbr.rel (0) target = $region45
    $region44: #{_lambda_.1} parent=1 // pred_region
      _
    $region45: #{_lambda_.1} parent=1 // pred_fallthru
      _
    // Predicated region
    $region46: #{_lambda_.1} parent=1 // pred_check
      _
    $region47: #{_lambda_.1} parent=1 // pred_check_branch
      %446 = sbr.rel (0) target = $region49
    $region48: #{_lambda_.1} parent=1 // pred_region
      _
    $region49: #{_lambda_.1} parent=1 // pred_fallthru
      _
    %447 = vsyncpa [#allocation3], 1

</llo_original>
